<compile_context>
chip_gen: v7x
topology: tpu7x:2x2x1
jax: 0.10.0
libtpu: 0.0.40
codegen_flags: <defaults>
</compile_context>

<pallas_src>
import functools

import jax
import jax.numpy as jnp
from jax.experimental import pallas as pl
from jax.experimental.pallas import tpu as pltpu

_PAIRWISE_EPS = 1e-6  # F.pairwise_distance default eps (added to the difference)


def _contrastive_loss_kernel(x1_ref, x2_ref, label_ref, out_ref, *,
                             margin, batch, tile_b, mask_pad):
    i = pl.program_id(0)

    # Zero the resident accumulator on the first grid step.
    @pl.when(i == 0)
    def _():
        out_ref[...] = jnp.zeros_like(out_ref)

    # Cast on the VMEM tile (inputs arrive in native dtype).
    diff = (x1_ref[...].astype(jnp.float32)
            - x2_ref[...].astype(jnp.float32)
            + _PAIRWISE_EPS)

    # Squared L2 per row, and euclidean distance (only needed for the hinge).
    sq = jnp.sum(diff * diff, axis=-1, keepdims=True)          # [TB, 1]
    dist = jnp.sqrt(sq)                                         # [TB, 1]

    label = label_ref[...].astype(jnp.float32)                  # [TB, 1]

    pos_term = (1.0 - label) * sq                               # d^2 without sqrt round-trip
    hinge = jnp.maximum(margin - dist, 0.0)
    neg_term = label * (hinge * hinge)
    per_sample = pos_term + neg_term                            # [TB, 1]

    if mask_pad:
        row = i * tile_b + jax.lax.broadcasted_iota(jnp.int32, (tile_b, 1), 0)
        per_sample = jnp.where(row < batch, per_sample, 0.0)

    # Accumulate this tile's partial sum into the resident (1,1) output.
    out_ref[...] += jnp.sum(per_sample, axis=0, keepdims=True)

    # Finalize: divide the running sum by the true batch size.
    @pl.when(i == pl.num_programs(0) - 1)
    def _():
        out_ref[...] *= jnp.float32(1.0 / batch)


def _round_up(x, m):
    return ((x + m - 1) // m) * m


def contrastive_loss(output1, output2, label, margin=1.0):
    """output1, output2: [B, D] (any float dtype); label: [B] or [B, 1].

    Returns a scalar f32 loss matching torch ContrastiveLoss.forward.
    """
    output1 = jnp.asarray(output1)
    output2 = jnp.asarray(output2).astype(output1.dtype)
    B, D = output1.shape
    label2d = jnp.asarray(label, dtype=jnp.float32).reshape(B, 1)

    itemsize = jnp.dtype(output1.dtype).itemsize
    sublane = {4: 8, 2: 16, 1: 32}.get(itemsize, 8)

    # Batch tile: ~2 MiB per input tile (2 inputs x 2 pipeline buffers -> ~8 MiB
    # of VMEM, safe on all chips), rounded to the sublane packing, capped at the
    # (padded) batch size.
    target_bytes = 2 * 1024 * 1024
    rows_for_target = max(target_bytes // max(D * itemsize, 1), sublane)
    tb = max((rows_for_target // sublane) * sublane, sublane)
    tb = min(tb, _round_up(B, sublane))

    num_tiles = pl.cdiv(B, tb)
    b_pad = num_tiles * tb

    if b_pad != B:
        pad = b_pad - B
        output1 = jnp.pad(output1, ((0, pad), (0, 0)))
        output2 = jnp.pad(output2, ((0, pad), (0, 0)))
        label2d = jnp.pad(label2d, ((0, pad), (0, 0)))

    kernel = functools.partial(
        _contrastive_loss_kernel,
        margin=float(margin),
        batch=B,
        tile_b=tb,
        mask_pad=(b_pad != B),
    )

    out = pl.pallas_call(
        kernel,
        out_shape=jax.ShapeDtypeStruct((1, 1), jnp.float32),
        grid=(num_tiles,),
        in_specs=[
            pl.BlockSpec((tb, D), lambda i: (i, 0)),
            pl.BlockSpec((tb, D), lambda i: (i, 0)),
            pl.BlockSpec((tb, 1), lambda i: (i, 0)),
        ],
        out_specs=pl.BlockSpec((1, 1), lambda i: (0, 0)),
        compiler_params=pltpu.CompilerParams(
            dimension_semantics=("arbitrary",),  # reduction axis: output is resident
        ),
    )(output1, output2, label2d)

    return out[0, 0]


def _reference_loss(output1, output2, label, margin=1.0):
    diff = output1.astype(jnp.float32) - output2.astype(jnp.float32) + _PAIRWISE_EPS
    dist = jnp.sqrt(jnp.sum(diff * diff, axis=-1))
    label = jnp.asarray(label, dtype=jnp.float32).reshape(-1)
    hinge = jnp.clip(margin - dist, 0.0, None)
    return jnp.mean((1.0 - label) * dist**2 + label * hinge**2)


if __name__ == "__main__":
    key = jax.random.PRNGKey(0)
    k1, k2, k3, k4, k5, k6 = jax.random.split(key, 6)

    # Case 1: small f32 embedding pairs (batch divisible by the sublane tile).
    B, D = 8, 32
    o1 = jax.random.normal(k1, (B, D), dtype=jnp.float32)
    o2 = jax.random.normal(k2, (B, D), dtype=jnp.float32)
    lab = jax.random.bernoulli(k3, 0.5, (B,)).astype(jnp.float32)

    loss = contrastive_loss(o1, o2, lab, margin=1.0)
    jax.block_until_ready(loss)
    ref = _reference_loss(o1, o2, lab, margin=1.0)
    assert jnp.allclose(loss, ref, rtol=1e-5, atol=1e-5), (loss, ref)

    # Case 2: bf16 inputs with a ragged batch (exercises native-dtype path + padding mask).
    B2, D2 = 13, 32
    o1b = jax.random.normal(k4, (B2, D2), dtype=jnp.bfloat16)
    o2b = jax.random.normal(k5, (B2, D2), dtype=jnp.bfloat16)
    labb = jax.random.bernoulli(k6, 0.5, (B2,)).astype(jnp.float32)

    loss2 = contrastive_loss(o1b, o2b, labb, margin=1.0)
    jax.block_until_ready(loss2)
    ref2 = _reference_loss(o1b, o2b, labb, margin=1.0)
    assert jnp.allclose(loss2, ref2, rtol=1e-4, atol=1e-4), (loss2, ref2)

    print("KERNEL_OK")
</pallas_src>

<mosaic_0001>
module attributes {stable_mosaic.version = 11 : i64} {
  func.func @_contrastive_loss_kernel(%arg0: i32, %arg1: memref<8x32xf32, #tpu.memory_space<vmem>>, %arg2: memref<8x32xf32, #tpu.memory_space<vmem>>, %arg3: memref<8x1xf32, #tpu.memory_space<vmem>>, %arg4: memref<1x1xf32, #tpu.memory_space<vmem>>) attributes {dimension_semantics = [#tpu.dimension_semantics<arbitrary>], iteration_bounds = array<i64: 1>, scalar_prefetch = 0 : i64, scratch_operands = 0 : i64, tpu.core_type = #tpu.core_type<tc>, window_params = [{transform_indices = @transform_0, window_bounds = array<i64: 8, 32>}, {transform_indices = @transform_1, window_bounds = array<i64: 8, 32>}, {transform_indices = @transform_2, window_bounds = array<i64: 8, 1>}, {pipeline_mode = #tpu.pipeline_mode<synchronous>, transform_indices = @transform_3, window_bounds = array<i64: 1, 1>}]} {
    %c0_i32 = arith.constant 0 : i32
    %0 = arith.cmpi eq, %arg0, %c0_i32 : i32
    %1 = arith.extui %0 : i1 to i32
    %c0_i32_0 = arith.constant 0 : i32
    %2 = arith.cmpi ne, %1, %c0_i32_0 : i32
    scf.if %2 {
      %cst_17 = arith.constant 0.000000e+00 : f32
      %31 = vector.broadcast %cst_17 : f32 to vector<1x1xf32>
      %c0_18 = arith.constant 0 : index
      %c0_19 = arith.constant 0 : index
      %32 = vector.load %arg4[%c0_18, %c0_19] : memref<1x1xf32, #tpu.memory_space<vmem>>, vector<1x1xf32>
      tpu.vector_store %arg4[%c0_18, %c0_19], %31 {strides = array<i32>} : memref<1x1xf32, #tpu.memory_space<vmem>>, vector<1x1xf32>,
    } else {
    }
    %c0 = arith.constant 0 : index
    %c0_1 = arith.constant 0 : index
    %3 = vector.load %arg1[%c0, %c0_1] : memref<8x32xf32, #tpu.memory_space<vmem>>, vector<8x32xf32>
    %c0_2 = arith.constant 0 : index
    %c0_3 = arith.constant 0 : index
    %4 = vector.load %arg2[%c0_2, %c0_3] : memref<8x32xf32, #tpu.memory_space<vmem>>, vector<8x32xf32>
    %5 = arith.subf %3, %4 : vector<8x32xf32>
    %cst = arith.constant 9.99999997E-7 : f32
    %6 = vector.broadcast %cst : f32 to vector<8x32xf32>
    %7 = arith.addf %5, %6 : vector<8x32xf32>
    %8 = arith.mulf %7, %7 : vector<8x32xf32>
    %cst_4 = arith.constant dense<0.000000e+00> : vector<8xf32>
    %9 = vector.multi_reduction <add>, %8, %cst_4 [1] : vector<8x32xf32> to vector<8xf32>
    %10 = vector.shape_cast %9 : vector<8xf32> to vector<8x1xf32>
    %11 = math.sqrt %10 : vector<8x1xf32>
    %c0_5 = arith.constant 0 : index
    %c0_6 = arith.constant 0 : index
    %12 = vector.load %arg3[%c0_5, %c0_6] : memref<8x1xf32, #tpu.memory_space<vmem>>, vector<8x1xf32>
    %cst_7 = arith.constant 1.000000e+00 : f32
    %13 = vector.broadcast %cst_7 : f32 to vector<8x1xf32>
    %14 = arith.subf %13, %12 : vector<8x1xf32>
    %15 = arith.mulf %14, %10 : vector<8x1xf32>
    %cst_8 = arith.constant 1.000000e+00 : f32
    %16 = vector.broadcast %cst_8 : f32 to vector<8x1xf32>
    %17 = arith.subf %16, %11 : vector<8x1xf32>
    %cst_9 = arith.constant 0.000000e+00 : f32
    %18 = vector.broadcast %cst_9 : f32 to vector<8x1xf32>
    %19 = arith.maximumf %17, %18 : vector<8x1xf32>
    %20 = arith.mulf %19, %19 : vector<8x1xf32>
    %21 = arith.mulf %12, %20 : vector<8x1xf32>
    %22 = arith.addf %15, %21 : vector<8x1xf32>
    %c0_10 = arith.constant 0 : index
    %c0_11 = arith.constant 0 : index
    %23 = vector.load %arg4[%c0_10, %c0_11] : memref<1x1xf32, #tpu.memory_space<vmem>>, vector<1x1xf32>
    %cst_12 = arith.constant dense<0.000000e+00> : vector<1xf32>
    %24 = vector.multi_reduction <add>, %22, %cst_12 [0] : vector<8x1xf32> to vector<1xf32>
    %25 = vector.shape_cast %24 : vector<1xf32> to vector<1x1xf32>
    %26 = arith.addf %23, %25 : vector<1x1xf32>
    %c0_13 = arith.constant 0 : index
    %c0_14 = arith.constant 0 : index
    %27 = vector.load %arg4[%c0_13, %c0_14] : memref<1x1xf32, #tpu.memory_space<vmem>>, vector<1x1xf32>
    tpu.vector_store %arg4[%c0_13, %c0_14], %26 {strides = array<i32>} : memref<1x1xf32, #tpu.memory_space<vmem>>, vector<1x1xf32>,
    %c0_i32_15 = arith.constant 0 : i32
    %28 = arith.cmpi eq, %arg0, %c0_i32_15 : i32
    %29 = arith.extui %28 : i1 to i32
    %c0_i32_16 = arith.constant 0 : i32
    %30 = arith.cmpi ne, %29, %c0_i32_16 : i32
    scf.if %30 {
      %c0_17 = arith.constant 0 : index
      %c0_18 = arith.constant 0 : index
      %31 = vector.load %arg4[%c0_17, %c0_18] : memref<1x1xf32, #tpu.memory_space<vmem>>, vector<1x1xf32>
      %cst_19 = arith.constant 1.250000e-01 : f32
      %32 = vector.broadcast %cst_19 : f32 to vector<1x1xf32>
      %33 = arith.mulf %31, %32 : vector<1x1xf32>
      %c0_20 = arith.constant 0 : index
      %c0_21 = arith.constant 0 : index
      %34 = vector.load %arg4[%c0_20, %c0_21] : memref<1x1xf32, #tpu.memory_space<vmem>>, vector<1x1xf32>
      tpu.vector_store %arg4[%c0_20, %c0_21], %33 {strides = array<i32>} : memref<1x1xf32, #tpu.memory_space<vmem>>, vector<1x1xf32>,
    } else {
    }
    return
  }
  func.func @transform_0(%arg0: i32) -> (i32, i32) {
    %c0_i32 = arith.constant 0 : i32
    %c0_i32_0 = arith.constant 0 : i32
    return %arg0, %c0_i32 : i32, i32
  }
  func.func @transform_1(%arg0: i32) -> (i32, i32) {
    %c0_i32 = arith.constant 0 : i32
    %c0_i32_0 = arith.constant 0 : i32
    return %arg0, %c0_i32 : i32, i32
  }
  func.func @transform_2(%arg0: i32) -> (i32, i32) {
    %c0_i32 = arith.constant 0 : i32
    %c0_i32_0 = arith.constant 0 : i32
    return %arg0, %c0_i32 : i32, i32
  }
  func.func @transform_3(%arg0: i32) -> (i32, i32) {
    %c0_i32 = arith.constant 0 : i32
    %c0_i32_0 = arith.constant 0 : i32
    %c0_i32_1 = arith.constant 0 : i32
    return %c0_i32, %c0_i32_0 : i32, i32
  }
}

</mosaic_0001>

<llo_original>
// kernel: tpu_custom_call.1
$region0: #{tpu_custom_call.1}
  #allocation0 [shape = 'u32[]', space=smem, size = 0x4, offset = 0x4, fixed_abs, tag = 'smem constant byte address 0x4 - core index']
  #allocation1 [shape = 'u32[144,128]{1,0:T(1,128)}', space=vmem, size = 0x12000, scoped, tag = 'internal scratch']
  %s0 = inlined_call_operand.vmem [shape: f32[8,32], index: 0, kind: input, shape index: {}]
  %s1 = inlined_call_operand.hbm [shape: f32[8,32], index: 1, kind: input, shape index: {}]
  %s2 = inlined_call_operand.vmem [shape: f32[8,1], index: 2, kind: input, shape index: {}]
  %s3 = inlined_call_operand.hbm [shape: f32[1,1], index: 3, kind: output, shape index: {}]
  %s4 = sld [smem:[#allocation0]]
  $region34: #{tpu_custom_call.1} parent=0
    _
  %s6 = ssub.s32 1, %s4
  %s7 = scalar_select 0, %s6, %s4
  $region1: #{tpu_custom_call.1} parent=0
    #allocation2 [shape = 'u8[4096]{0}', space=vmem, size = 0x1000, scoped, tag = 'input window, operand 1, single buffered']
    #allocation3 [shape = 's32[1]{0}', space=sflag, size = 0x4, scoped, tag = 'scoped memory for tpu_custom_call.1']
    #allocation4 [shape = 's32[1]{0}', space=sflag, size = 0x4, scoped, tag = 'scoped memory for tpu_custom_call.1']
    #allocation5 [shape = 'u8[512]{0}', space=vmem, size = 0x400, scoped, tag = 'output window, operand 0, single buffered']
    %8 = vsyncpa [#allocation3], 0
    %9 = vsyncpa [#allocation4], 0
    // Predicated region
    $region2: #{tpu_custom_call.1} parent=1 // pred_check
      _
    $region3: #{tpu_custom_call.1} parent=1 // pred_check_branch
      %11 = sbr.rel (0) target = $region5
    $region4: #{tpu_custom_call.1} parent=1 // pred_region
      _
    $region5: #{tpu_custom_call.1} parent=1 // pred_fallthru
      _
    // Predicated region
    $region6: #{tpu_custom_call.1} parent=1 // pred_check
      _
    $region7: #{tpu_custom_call.1} parent=1 // pred_check_branch
      %13 = sbr.rel (0) target = $region9
    $region8: #{tpu_custom_call.1} parent=1 // pred_region
      %s15 = ssub.s32 128, 128
      %16 = vsyncadd [#allocation3], %s15
      %s18 = sshll.u32 [#allocation2], 4
      %s19 = int_to_ptr.vmem [resolvable:$true] %s18
      %21 = dma.hbm_to_vmem [thread:$0]  %s1, 128, %s19, [#allocation3]
    $region9: #{tpu_custom_call.1} parent=1 // pred_fallthru
      _
    // Predicated region
    $region10: #{tpu_custom_call.1} parent=1 // pred_check
      _
    $region11: #{tpu_custom_call.1} parent=1 // pred_check_branch
      %23 = sbr.rel (0) target = $region13
    $region12: #{tpu_custom_call.1} parent=1 // pred_region
      _
    $region13: #{tpu_custom_call.1} parent=1 // pred_fallthru
      _
    // Predicated region
    $region14: #{tpu_custom_call.1} parent=1 // pred_check
      _
    $region15: #{tpu_custom_call.1} parent=1 // pred_check_branch
      %25 = sbr.rel (0) target = $region17
    $region16: #{tpu_custom_call.1} parent=1 // pred_region
      %26 = dma.done [#allocation3], 128
    $region17: #{tpu_custom_call.1} parent=1 // pred_fallthru
      _
    %p27 = scmp.eq.s32.totalorder 0, 0
    // Predicated region
    $region18: #{tpu_custom_call.1} parent=1 // pred_check
      %p28 = pneg %p27
    $region19: #{tpu_custom_call.1} parent=1 // pred_check_branch
      %30 = sbr.rel (%p28) target = $region21
    $region20: #{tpu_custom_call.1} parent=1 // pred_region
      %vm31 = vcmask 0
      %32 = vst.msk [vmem:[#allocation5] sm:$0x1] %vm31, 0.0
    $region21: #{tpu_custom_call.1} parent=1 // pred_fallthru
      _
    %v33 = vld [vmem:[%s0] sm:$0xff]
    %v34 = vld [vmem:[#allocation2] sm:$0xff]
    %v35 = vsub.f32 %v33, %v34
    %v36 = vadd.f32 %v35, 1e-06
    %v37 = vmul.f32 %v36, %v36
    %vm38 = vcmask 261120
    %v39 = vsel %vm38, %v37, 0.0
    %40 = vadd.xlane.f32.xlu0 %v39
    %v41 = vpop.xlane.xlu0 %40
    %v42 = vrsqrt.pop %v41
    %v43 = vmul.f32 %v41, %v42
    %vm44 = vcmp.eq.f32.partialorder %v41, inf
    %v45 = vsel %vm44, %v41, %v43
    %vm46 = vcmp.eq.f32.partialorder %v41, 0.0
    %v47 = vand.u32 %v41, 2147483648
    %v48 = vsel %vm46, %v47, %v45
    %v49 = vld [vmem:[%s2] sm:$0xff]
    %v50 = vsub.f32 1.0, %v49
    %v51 = vmul.f32 %v50, %v41
    %v52 = vsub.f32 1.0, %v48
    %v53 = vmax.f32 %v52, 0.0
    %v54 = vmul.f32 %v53, %v53
    %v55 = vmul.f32 %v49, %v54
    %v56 = vadd.f32 %v51, %v55
    %v57 = vld [vmem:[#allocation5] sm:$0x1]
    %vm58 = vcmask 7168
    %v59 = vsel %vm58, %v56, 0.0
    %v60 = vrot.slane %v59, 4
    %v61 = vadd.f32 %v59, %v60
    %v62 = vrot.slane %v61, 2
    %v63 = vadd.f32 %v61, %v62
    %v64 = vrot.slane %v63, 1
    %v65 = vadd.f32 %v63, %v64
    %v66 = vadd.f32 %v57, %v65
    %vm67 = vcmask 0
    %68 = vst.msk [vmem:[#allocation5] sm:$0x1] %vm67, %v66
    // Predicated region
    $region22: #{tpu_custom_call.1} parent=1 // pred_check
      %p69 = pneg %p27
    $region23: #{tpu_custom_call.1} parent=1 // pred_check_branch
      %71 = sbr.rel (%p69) target = $region25
    $region24: #{tpu_custom_call.1} parent=1 // pred_region
      %v72 = vld [vmem:[#allocation5] sm:$0x1]
      %v73 = vmul.f32 %v72, 0.125
      %74 = vst.msk [vmem:[#allocation5] sm:$0x1] %vm67, %v73
    $region25: #{tpu_custom_call.1} parent=1 // pred_fallthru
      _
    // Predicated region
    $region26: #{tpu_custom_call.1} parent=1 // pred_check
      _
    $region27: #{tpu_custom_call.1} parent=1 // pred_check_branch
      %76 = sbr.rel (0) target = $region29
    $region28: #{tpu_custom_call.1} parent=1 // pred_region
      %s78 = ssub.s32 16, 16
      %79 = vsyncadd [#allocation4], %s78
      %s81 = sshll.u32 [#allocation5], 4
      %s82 = int_to_ptr.vmem [resolvable:$true] %s81
      %84 = dma.vmem_to_hbm [thread:$0]  %s82, 16, %s3, [#allocation4]
    $region29: #{tpu_custom_call.1} parent=1 // pred_fallthru
      _
    // Predicated region
    $region30: #{tpu_custom_call.1} parent=1 // pred_check
      _
    $region31: #{tpu_custom_call.1} parent=1 // pred_check_branch
      %86 = sbr.rel (0) target = $region33
    $region32: #{tpu_custom_call.1} parent=1 // pred_region
      %87 = dma.done [#allocation4], 16
    $region33: #{tpu_custom_call.1} parent=1 // pred_fallthru
      _
    %88 = vsyncpa [#allocation3], 1
    %89 = vsyncpa [#allocation4], 1

</llo_original>
